<compile_context>
chip_gen: v6e
topology: v6e:2x2x1
jax: 0.10.0
libtpu: 0.0.40
codegen_flags: <defaults>
</compile_context>

<pallas_src>
import jax
import jax.numpy as jnp
from jax.experimental import pallas as pl
from jax.experimental.pallas import tpu as pltpu


def make_rnc_forward(*, seq_length, n_assets, out_channels1, out_channels2,
                     hidden_size, time_kernel, batch_block=128,
                     compute_dtype=jnp.float32):
    N_CONTRACTS = 15
    A = n_assets
    T = seq_length
    TA = T * A
    KT = time_kernel
    Tout = T - KT + 1
    C1 = out_channels1
    C2 = out_channels2
    H = hidden_size
    F = C2 * Tout * A          # fc1 in_features (torch flatten order (c2, t, a))
    NO = A * N_CONTRACTS
    BBLK = batch_block         # batch elements per grid step (lane dimension)
    # For v7x, pick BBLK <= B/2 so the grid has >=2 parallel steps (2 TCs/chip).

    def kernel(x_ref, w1_ref, b1_ref, w2_ref, b2_ref, wf1_ref, bf1_ref,
               wf2_ref, bf2_ref, o_ref):
        x = x_ref[0]                                             # (15*T*A, BBLK)
        # conv1 as block-diagonal matmul
        h1 = jnp.dot(w1_ref[...], x,
                     preferred_element_type=jnp.float32) + b1_ref[...]
        h1 = jnp.maximum(h1, 0.0).astype(compute_dtype)          # (C1*T*A, BBLK)
        # conv2 as banded-block matmul (rows already in torch flatten order)
        h2 = jnp.dot(w2_ref[...], h1,
                     preferred_element_type=jnp.float32) + b2_ref[...]
        h2 = jnp.maximum(h2, 0.0).astype(compute_dtype)          # (F, BBLK)
        # fc1
        f1 = jnp.dot(wf1_ref[...], h2,
                     preferred_element_type=jnp.float32) + bf1_ref[...]
        f1 = jnp.maximum(f1, 0.0).astype(compute_dtype)          # (H, BBLK)
        # fc2 (output stays transposed: lane dim = batch)
        o_ref[0] = (jnp.dot(wf2_ref[...], f1,
                            preferred_element_type=jnp.float32)
                    + bf2_ref[...]).astype(o_ref.dtype)          # (NO, BBLK)

    def forward(x_nchw, params):
        (w1, b1, w2, b2, wfc1, bfc1, wfc2, bfc2) = params
        B = x_nchw.shape[0]
        G = -(-B // BBLK)                 # number of batch blocks (grid length)
        B_pad = G * BBLK

        # ---- glue: one-time weight folding (pure JAX, off the hot path) ----
        # conv1 (kernel (1,15), stride (1,15)):  W1_blk = kron(W1, I_{T*A})
        w1k = w1.reshape(C1, N_CONTRACTS)
        w1_blk = jnp.kron(w1k, jnp.eye(TA, dtype=jnp.float32))   # (C1*TA, 15*TA)
        b1e = jnp.repeat(b1, TA)[:, None]                        # (C1*TA, 1)
        # conv2 (kernel (KT,1), stride 1): banded block matrix, row order (c2,t,a)
        w2s = w2[:, :, :, 0]                                     # (C2, C1, KT)
        dt = jnp.arange(T)[None, :] - jnp.arange(Tout)[:, None]  # (Tout, T)
        valid = (dt >= 0) & (dt < KT)
        band = jnp.where(valid[None, None],
                         w2s[:, :, jnp.clip(dt, 0, KT - 1)], 0.0)  # (C2,C1,Tout,T)
        w2_blk = jnp.einsum('cdtu,ae->ctadue', band,
                            jnp.eye(A, dtype=jnp.float32)
                            ).reshape(F, C1 * TA)                # (F, C1*TA)
        b2e = jnp.repeat(b2, Tout * A)[:, None]                  # (F, 1)
        bf1e = bfc1[:, None]                                     # (H, 1)
        bf2e = bfc2[:, None]                                     # (NO, 1)

        # ---- glue: batch-blocked, lane-major input layout ----
        # xk[g, k*T*A + t*A + a, bb] = x[g*BBLK+bb, 0, t, a*15 + k]
        x4 = x_nchw.reshape(B, T, A, N_CONTRACTS)
        if B_pad != B:
            x4 = jnp.pad(x4, ((0, B_pad - B), (0, 0), (0, 0), (0, 0)))
        x5 = x4.reshape(G, BBLK, T, A, N_CONTRACTS)
        xk = jnp.transpose(x5, (0, 4, 2, 3, 1)).reshape(G, N_CONTRACTS * TA, BBLK)

        cdt = compute_dtype
        out = pl.pallas_call(
            kernel,
            out_shape=jax.ShapeDtypeStruct((G, NO, BBLK), jnp.float32),
            grid_spec=pl.GridSpec(
                grid=(G,),
                in_specs=[
                    pl.BlockSpec((1, N_CONTRACTS * TA, BBLK), lambda g: (g, 0, 0)),
                    pl.BlockSpec((C1 * TA, N_CONTRACTS * TA), lambda g: (0, 0)),
                    pl.BlockSpec((C1 * TA, 1), lambda g: (0, 0)),
                    pl.BlockSpec((F, C1 * TA), lambda g: (0, 0)),
                    pl.BlockSpec((F, 1), lambda g: (0, 0)),
                    pl.BlockSpec((H, F), lambda g: (0, 0)),
                    pl.BlockSpec((H, 1), lambda g: (0, 0)),
                    pl.BlockSpec((NO, H), lambda g: (0, 0)),
                    pl.BlockSpec((NO, 1), lambda g: (0, 0)),
                ],
                out_specs=pl.BlockSpec((1, NO, BBLK), lambda g: (g, 0, 0)),
            ),
            # VMEM per step ~1 MiB at BBLK=128; set vmem_limit_bytes explicitly
            # only if BBLK is pushed past a few thousand.
            compiler_params=pltpu.CompilerParams(
                dimension_semantics=("parallel",)),
        )(xk.astype(cdt), w1_blk.astype(cdt), b1e.astype(jnp.float32),
          w2_blk.astype(cdt), b2e.astype(jnp.float32),
          wfc1.astype(cdt), bf1e.astype(jnp.float32),
          wfc2.astype(cdt), bf2e.astype(jnp.float32))

        # un-transpose: (G, NO, BBLK) -> (B, NO)
        return jnp.transpose(out, (0, 2, 1)).reshape(B_pad, NO)[:B]

    return forward


def rnc_reference(x_nchw, params, *, seq_length, n_assets, time_kernel):
    """Pure-JAX reference with the same math as the PyTorch module (ReLU)."""
    (w1, b1, w2, b2, wfc1, bfc1, wfc2, bfc2) = params
    B = x_nchw.shape[0]
    T, A, K = seq_length, n_assets, 15
    KT = time_kernel
    Tout = T - KT + 1
    x4 = x_nchw.reshape(B, T, A, K)
    h1 = jnp.einsum('btak,ck->bcta', x4, w1[:, 0, 0, :]) + b1[None, :, None, None]
    h1 = jnp.maximum(h1, 0.0)
    h2 = jnp.zeros((B, w2.shape[0], Tout, A), jnp.float32)
    for dt in range(KT):
        h2 = h2 + jnp.einsum('bita,oi->bota', h1[:, :, dt:dt + Tout, :],
                             w2[:, :, dt, 0])
    h2 = jnp.maximum(h2 + b2[None, :, None, None], 0.0)
    flat = h2.reshape(B, -1)
    f1 = jnp.maximum(flat @ wfc1.T + bfc1, 0.0)
    return f1 @ wfc2.T + bfc2


def init_params(key, *, seq_length, n_assets, out_channels1, out_channels2,
                hidden_size, time_kernel):
    C1, C2, H, KT = out_channels1, out_channels2, hidden_size, time_kernel
    Tout = seq_length - KT + 1
    F = Tout * C2 * n_assets
    NO = n_assets * 15
    keys = jax.random.split(key, 8)

    def u(k, shape, fan_in):
        b = 1.0 / jnp.sqrt(jnp.asarray(fan_in, jnp.float32))
        return jax.random.uniform(k, shape, jnp.float32, -b, b)

    w1 = u(keys[0], (C1, 1, 1, 15), 15)
    b1 = u(keys[1], (C1,), 15)
    w2 = u(keys[2], (C2, C1, KT, 1), C1 * KT)
    b2 = u(keys[3], (C2,), C1 * KT)
    wfc1 = u(keys[4], (H, F), F)
    bfc1 = u(keys[5], (H,), F)
    wfc2 = u(keys[6], (NO, H), H)
    bfc2 = u(keys[7], (NO,), H)
    return (w1, b1, w2, b2, wfc1, bfc1, wfc2, bfc2)


if __name__ == "__main__":
    # module defaults: seq_length=21, n_assets=2, out_channels=2/2, hidden=32,
    # time_kernel=(5,1)  ->  input (B, 1, 21, 30)
    SEQ, A, C1, C2, H, KT = 21, 2, 2, 2, 32, 5
    B = 2

    key = jax.random.PRNGKey(0)
    kx, kp = jax.random.split(key)
    x = jax.random.normal(kx, (B, 1, SEQ, A * 15), jnp.float32)
    params = init_params(kp, seq_length=SEQ, n_assets=A, out_channels1=C1,
                         out_channels2=C2, hidden_size=H, time_kernel=KT)

    forward = jax.jit(make_rnc_forward(
        seq_length=SEQ, n_assets=A, out_channels1=C1, out_channels2=C2,
        hidden_size=H, time_kernel=KT, batch_block=128,
        compute_dtype=jnp.float32))

    out = jax.block_until_ready(forward(x, params))
    ref = jax.block_until_ready(
        rnc_reference(x, params, seq_length=SEQ, n_assets=A, time_kernel=KT))

    assert out.shape == (B, A * 15), out.shape
    # f32 operands with f32 accumulation; slightly relaxed vs 1e-4 only to
    # absorb differing accumulation order of the folded conv matmuls.
    assert jnp.allclose(out, ref, atol=2e-4, rtol=2e-4), (
        float(jnp.max(jnp.abs(out - ref))))
    print("KERNEL_OK")
</pallas_src>

<mosaic_0001>
module attributes {stable_mosaic.version = 11 : i64} {
  func.func @kernel(%arg0: i32, %arg1: memref<1x630x128xf32, #tpu.memory_space<vmem>>, %arg2: memref<84x630xf32, #tpu.memory_space<vmem>>, %arg3: memref<84x1xf32, #tpu.memory_space<vmem>>, %arg4: memref<68x84xf32, #tpu.memory_space<vmem>>, %arg5: memref<68x1xf32, #tpu.memory_space<vmem>>, %arg6: memref<32x68xf32, #tpu.memory_space<vmem>>, %arg7: memref<32x1xf32, #tpu.memory_space<vmem>>, %arg8: memref<30x32xf32, #tpu.memory_space<vmem>>, %arg9: memref<30x1xf32, #tpu.memory_space<vmem>>, %arg10: memref<1x30x128xf32, #tpu.memory_space<vmem>>) attributes {dimension_semantics = [#tpu.dimension_semantics<parallel>], iteration_bounds = array<i64: 1>, scalar_prefetch = 0 : i64, scratch_operands = 0 : i64, tpu.core_type = #tpu.core_type<tc>, window_params = [{transform_indices = @transform_0, window_bounds = array<i64: 1, 630, 128>}, {pipeline_mode = #tpu.pipeline_mode<synchronous>, transform_indices = @transform_1, window_bounds = array<i64: 84, 630>}, {pipeline_mode = #tpu.pipeline_mode<synchronous>, transform_indices = @transform_2, window_bounds = array<i64: 84, 1>}, {pipeline_mode = #tpu.pipeline_mode<synchronous>, transform_indices = @transform_3, window_bounds = array<i64: 68, 84>}, {pipeline_mode = #tpu.pipeline_mode<synchronous>, transform_indices = @transform_4, window_bounds = array<i64: 68, 1>}, {pipeline_mode = #tpu.pipeline_mode<synchronous>, transform_indices = @transform_5, window_bounds = array<i64: 32, 68>}, {pipeline_mode = #tpu.pipeline_mode<synchronous>, transform_indices = @transform_6, window_bounds = array<i64: 32, 1>}, {pipeline_mode = #tpu.pipeline_mode<synchronous>, transform_indices = @transform_7, window_bounds = array<i64: 30, 32>}, {pipeline_mode = #tpu.pipeline_mode<synchronous>, transform_indices = @transform_8, window_bounds = array<i64: 30, 1>}, {transform_indices = @transform_9, window_bounds = array<i64: 1, 30, 128>}]} {
    %c0 = arith.constant 0 : index
    %c0_0 = arith.constant 0 : index
    %c0_1 = arith.constant 0 : index
    %0 = vector.load %arg1[%c0, %c0_0, %c0_1] : memref<1x630x128xf32, #tpu.memory_space<vmem>>, vector<1x630x128xf32>
    %1 = vector.shape_cast %0 : vector<1x630x128xf32> to vector<630x128xf32>
    %c0_2 = arith.constant 0 : index
    %c0_3 = arith.constant 0 : index
    %2 = vector.load %arg2[%c0_2, %c0_3] : memref<84x630xf32, #tpu.memory_space<vmem>>, vector<84x630xf32>
    %cst = arith.constant dense<0.000000e+00> : vector<84x128xf32>
    %3 = tpu.matmul %2, %1, %cst {dimension_numbers = #tpu.dot_dimension_numbers<[1], [0], [0], [1], [0, 0, 1, 1], [], []>} : vector<84x630xf32>, vector<630x128xf32>, vector<84x128xf32> -> vector<84x128xf32>
    %c0_4 = arith.constant 0 : index
    %c0_5 = arith.constant 0 : index
    %4 = vector.load %arg3[%c0_4, %c0_5] : memref<84x1xf32, #tpu.memory_space<vmem>>, vector<84x1xf32>
    %5 = vector.broadcast %4 : vector<84x1xf32> to vector<84x128xf32>
    %6 = arith.addf %3, %5 : vector<84x128xf32>
    %cst_6 = arith.constant 0.000000e+00 : f32
    %7 = vector.broadcast %cst_6 : f32 to vector<84x128xf32>
    %8 = arith.maximumf %6, %7 : vector<84x128xf32>
    %c0_7 = arith.constant 0 : index
    %c0_8 = arith.constant 0 : index
    %9 = vector.load %arg4[%c0_7, %c0_8] : memref<68x84xf32, #tpu.memory_space<vmem>>, vector<68x84xf32>
    %cst_9 = arith.constant dense<0.000000e+00> : vector<68x128xf32>
    %10 = tpu.matmul %9, %8, %cst_9 {dimension_numbers = #tpu.dot_dimension_numbers<[1], [0], [0], [1], [0, 0, 1, 1], [], []>} : vector<68x84xf32>, vector<84x128xf32>, vector<68x128xf32> -> vector<68x128xf32>
    %c0_10 = arith.constant 0 : index
    %c0_11 = arith.constant 0 : index
    %11 = vector.load %arg5[%c0_10, %c0_11] : memref<68x1xf32, #tpu.memory_space<vmem>>, vector<68x1xf32>
    %12 = vector.broadcast %11 : vector<68x1xf32> to vector<68x128xf32>
    %13 = arith.addf %10, %12 : vector<68x128xf32>
    %cst_12 = arith.constant 0.000000e+00 : f32
    %14 = vector.broadcast %cst_12 : f32 to vector<68x128xf32>
    %15 = arith.maximumf %13, %14 : vector<68x128xf32>
    %c0_13 = arith.constant 0 : index
    %c0_14 = arith.constant 0 : index
    %16 = vector.load %arg6[%c0_13, %c0_14] : memref<32x68xf32, #tpu.memory_space<vmem>>, vector<32x68xf32>
    %cst_15 = arith.constant dense<0.000000e+00> : vector<32x128xf32>
    %17 = tpu.matmul %16, %15, %cst_15 {dimension_numbers = #tpu.dot_dimension_numbers<[1], [0], [0], [1], [0, 0, 1, 1], [], []>} : vector<32x68xf32>, vector<68x128xf32>, vector<32x128xf32> -> vector<32x128xf32>
    %c0_16 = arith.constant 0 : index
    %c0_17 = arith.constant 0 : index
    %18 = vector.load %arg7[%c0_16, %c0_17] : memref<32x1xf32, #tpu.memory_space<vmem>>, vector<32x1xf32>
    %19 = vector.broadcast %18 : vector<32x1xf32> to vector<32x128xf32>
    %20 = arith.addf %17, %19 : vector<32x128xf32>
    %cst_18 = arith.constant 0.000000e+00 : f32
    %21 = vector.broadcast %cst_18 : f32 to vector<32x128xf32>
    %22 = arith.maximumf %20, %21 : vector<32x128xf32>
    %c0_19 = arith.constant 0 : index
    %c0_20 = arith.constant 0 : index
    %23 = vector.load %arg8[%c0_19, %c0_20] : memref<30x32xf32, #tpu.memory_space<vmem>>, vector<30x32xf32>
    %cst_21 = arith.constant dense<0.000000e+00> : vector<30x128xf32>
    %24 = tpu.matmul %23, %22, %cst_21 {dimension_numbers = #tpu.dot_dimension_numbers<[1], [0], [0], [1], [0, 0, 1, 1], [], []>} : vector<30x32xf32>, vector<32x128xf32>, vector<30x128xf32> -> vector<30x128xf32>
    %c0_22 = arith.constant 0 : index
    %c0_23 = arith.constant 0 : index
    %25 = vector.load %arg9[%c0_22, %c0_23] : memref<30x1xf32, #tpu.memory_space<vmem>>, vector<30x1xf32>
    %26 = vector.broadcast %25 : vector<30x1xf32> to vector<30x128xf32>
    %27 = arith.addf %24, %26 : vector<30x128xf32>
    %c0_24 = arith.constant 0 : index
    %c0_25 = arith.constant 0 : index
    %c0_26 = arith.constant 0 : index
    %28 = vector.load %arg10[%c0_24, %c0_25, %c0_26] : memref<1x30x128xf32, #tpu.memory_space<vmem>>, vector<1x30x128xf32>
    %29 = vector.shape_cast %28 : vector<1x30x128xf32> to vector<30x128xf32>
    %30 = vector.shape_cast %27 : vector<30x128xf32> to vector<1x30x128xf32>
    tpu.vector_store %arg10[%c0_24, %c0_25, %c0_26], %30 {strides = array<i32>} : memref<1x30x128xf32, #tpu.memory_space<vmem>>, vector<1x30x128xf32>,
    return
  }
  func.func @transform_0(%arg0: i32) -> (i32, i32, i32) {
    %c0_i32 = arith.constant 0 : i32
    %c0_i32_0 = arith.constant 0 : i32
    %c0_i32_1 = arith.constant 0 : i32
    return %arg0, %c0_i32, %c0_i32_0 : i32, i32, i32
  }
  func.func @transform_1(%arg0: i32) -> (i32, i32) {
    %c0_i32 = arith.constant 0 : i32
    %c0_i32_0 = arith.constant 0 : i32
    %c0_i32_1 = arith.constant 0 : i32
    return %c0_i32, %c0_i32_0 : i32, i32
  }
  func.func @transform_2(%arg0: i32) -> (i32, i32) {
    %c0_i32 = arith.constant 0 : i32
    %c0_i32_0 = arith.constant 0 : i32
    %c0_i32_1 = arith.constant 0 : i32
    return %c0_i32, %c0_i32_0 : i32, i32
  }
  func.func @transform_3(%arg0: i32) -> (i32, i32) {
    %c0_i32 = arith.constant 0 : i32
    %c0_i32_0 = arith.constant 0 : i32
    %c0_i32_1 = arith.constant 0 : i32
    return %c0_i32, %c0_i32_0 : i32, i32
  }
  func.func @transform_4(%arg0: i32) -> (i32, i32) {
    %c0_i32 = arith.constant 0 : i32
    %c0_i32_0 = arith.constant 0 : i32
    %c0_i32_1 = arith.constant 0 : i32
    return %c0_i32, %c0_i32_0 : i32, i32
  }
  func.func @transform_5(%arg0: i32) -> (i32, i32) {
    %c0_i32 = arith.constant 0 : i32
    %c0_i32_0 = arith.constant 0 : i32
    %c0_i32_1 = arith.constant 0 : i32
    return %c0_i32, %c0_i32_0 : i32, i32
  }
  func.func @transform_6(%arg0: i32) -> (i32, i32) {
    %c0_i32 = arith.constant 0 : i32
    %c0_i32_0 = arith.constant 0 : i32
    %c0_i32_1 = arith.constant 0 : i32
    return %c0_i32, %c0_i32_0 : i32, i32
  }
  func.func @transform_7(%arg0: i32) -> (i32, i32) {
    %c0_i32 = arith.constant 0 : i32
    %c0_i32_0 = arith.constant 0 : i32
    %c0_i32_1 = arith.constant 0 : i32
    return %c0_i32, %c0_i32_0 : i32, i32
  }
  func.func @transform_8(%arg0: i32) -> (i32, i32) {
    %c0_i32 = arith.constant 0 : i32
    %c0_i32_0 = arith.constant 0 : i32
    %c0_i32_1 = arith.constant 0 : i32
    return %c0_i32, %c0_i32_0 : i32, i32
  }
  func.func @transform_9(%arg0: i32) -> (i32, i32, i32) {
    %c0_i32 = arith.constant 0 : i32
    %c0_i32_0 = arith.constant 0 : i32
    %c0_i32_1 = arith.constant 0 : i32
    return %arg0, %c0_i32, %c0_i32_0 : i32, i32, i32
  }
}

</mosaic_0001>

<llo_original>
// kernel: forward.1
$region0: #{forward.1}
  #allocation0 [shape = 'u32[]', space=smem, size = 0x4, offset = 0x4, fixed_abs, tag = 'smem constant byte address 0x4 - core index']
  #allocation1 [shape = 'u32[144,128]{1,0:T(1,128)}', space=vmem, size = 0x12000, scoped, tag = 'internal scratch']
  %s0 = inlined_call_operand.vmem [shape: f32[1,630,128], index: 0, kind: input, shape index: {}]
  %s1 = inlined_call_operand.vmem [shape: f32[84,630], index: 1, kind: input, shape index: {}]
  %s2 = inlined_call_operand.vmem [shape: f32[84,1], index: 2, kind: input, shape index: {}]
  %s3 = inlined_call_operand.vmem [shape: f32[68,84], index: 3, kind: input, shape index: {}]
  %s4 = inlined_call_operand.vmem [shape: f32[68,1], index: 4, kind: input, shape index: {}]
  %s5 = inlined_call_operand.vmem [shape: f32[32,68], index: 5, kind: input, shape index: {}]
  %s6 = inlined_call_operand.vmem [shape: f32[32,1], index: 6, kind: input, shape index: {}]
  %s7 = inlined_call_operand.vmem [shape: f32[30,32], index: 7, kind: input, shape index: {}]
  %s8 = inlined_call_operand.vmem [shape: f32[30,1], index: 8, kind: input, shape index: {}]
  %s9 = inlined_call_operand.vmem [shape: f32[1,30,128], index: 9, kind: output, shape index: {}]
  %s10 = sld [smem:[#allocation0]]
  $region46: #{forward.1} parent=0
    _
  %s12 = ssub.s32 1, %s10
  %s13 = scalar_select 0, %s12, %s10
  // Predicated region
  $region2: #{forward.1} parent=0 // pred_check
    _
  $region3: #{forward.1} parent=0 // pred_check_branch
    %15 = sbr.rel (0) target = $region5
  $region4: #{forward.1} parent=0 // pred_region
    _
  $region5: #{forward.1} parent=0 // pred_fallthru
    _
  // Predicated region
  $region6: #{forward.1} parent=0 // pred_check
    _
  $region7: #{forward.1} parent=0 // pred_check_branch
    %17 = sbr.rel (0) target = $region9
  $region8: #{forward.1} parent=0 // pred_region
    _
  $region9: #{forward.1} parent=0 // pred_fallthru
    _
  // Predicated region
  $region10: #{forward.1} parent=0 // pred_check
    _
  $region11: #{forward.1} parent=0 // pred_check_branch
    %19 = sbr.rel (0) target = $region13
  $region12: #{forward.1} parent=0 // pred_region
    _
  $region13: #{forward.1} parent=0 // pred_fallthru
    _
  // Predicated region
  $region14: #{forward.1} parent=0 // pred_check
    _
  $region15: #{forward.1} parent=0 // pred_check_branch
    %21 = sbr.rel (0) target = $region17
  $region16: #{forward.1} parent=0 // pred_region
    _
  $region17: #{forward.1} parent=0 // pred_fallthru
    _
  // Predicated region
  $region18: #{forward.1} parent=0 // pred_check
    _
  $region19: #{forward.1} parent=0 // pred_check_branch
    %23 = sbr.rel (0) target = $region21
  $region20: #{forward.1} parent=0 // pred_region
    _
  $region21: #{forward.1} parent=0 // pred_fallthru
    _
  // Predicated region
  $region22: #{forward.1} parent=0 // pred_check
    _
  $region23: #{forward.1} parent=0 // pred_check_branch
    %25 = sbr.rel (0) target = $region25
  $region24: #{forward.1} parent=0 // pred_region
    _
  $region25: #{forward.1} parent=0 // pred_fallthru
    _
  // Predicated region
  $region26: #{forward.1} parent=0 // pred_check
    _
  $region27: #{forward.1} parent=0 // pred_check_branch
    %27 = sbr.rel (0) target = $region29
  $region28: #{forward.1} parent=0 // pred_region
    _
  $region29: #{forward.1} parent=0 // pred_fallthru
    _
  // Predicated region
  $region30: #{forward.1} parent=0 // pred_check
    _
  $region31: #{forward.1} parent=0 // pred_check_branch
    %29 = sbr.rel (0) target = $region33
  $region32: #{forward.1} parent=0 // pred_region
    _
  $region33: #{forward.1} parent=0 // pred_fallthru
    _
  // Predicated region
  $region34: #{forward.1} parent=0 // pred_check
    _
  $region35: #{forward.1} parent=0 // pred_check_branch
    %31 = sbr.rel (0) target = $region37
  $region36: #{forward.1} parent=0 // pred_region
    _
  $region37: #{forward.1} parent=0 // pred_fallthru
    _
  %v32 = vld [vmem:[%s0] sm:$0xff]
  %v33 = vld [vmem:[%s0 + $0x8] sm:$0xff]
  %v34 = vld [vmem:[%s0 + $0x10] sm:$0xff]
  %v35 = vld [vmem:[%s0 + $0x18] sm:$0xff]
  %v36 = vld [vmem:[%s0 + $0x20] sm:$0xff]
  %v37 = vld [vmem:[%s0 + $0x28] sm:$0xff]
  %v38 = vld [vmem:[%s0 + $0x30] sm:$0xff]
  %v39 = vld [vmem:[%s0 + $0x38] sm:$0xff]
  %v40 = vld [vmem:[%s0 + $0x40] sm:$0xff]
  %v41 = vld [vmem:[%s0 + $0x48] sm:$0xff]
  %v42 = vld [vmem:[%s0 + $0x50] sm:$0xff]
  %v43 = vld [vmem:[%s0 + $0x58] sm:$0xff]
  %v44 = vld [vmem:[%s0 + $0x60] sm:$0xff]
  %v45 = vld [vmem:[%s0 + $0x68] sm:$0xff]
  %v46 = vld [vmem:[%s0 + $0x70] sm:$0xff]
  %v47 = vld [vmem:[%s0 + $0x78] sm:$0xff]
  %v48 = vld [vmem:[%s0 + $0x80] sm:$0xff]
  %v49 = vld [vmem:[%s0 + $0x88] sm:$0xff]
  %v50 = vld [vmem:[%s0 + $0x90] sm:$0xff]
  %v51 = vld [vmem:[%s0 + $0x98] sm:$0xff]
  %v52 = vld [vmem:[%s0 + $0xa0] sm:$0xff]
  %v53 = vld [vmem:[%s0 + $0xa8] sm:$0xff]
  %v54 = vld [vmem:[%s0 + $0xb0] sm:$0xff]
  %v55 = vld [vmem:[%s0 + $0xb8] sm:$0xff]
  %v56 = vld [vmem:[%s0 + $0xc0] sm:$0xff]
  %v57 = vld [vmem:[%s0 + $0xc8] sm:$0xff]
  %v58 = vld [vmem:[%s0 + $0xd0] sm:$0xff]
  %v59 = vld [vmem:[%s0 + $0xd8] sm:$0xff]
  %v60 = vld [vmem:[%s0 + $0xe0] sm:$0xff]
  %v61 = vld [vmem:[%s0 + $0xe8] sm:$0xff]
  %v62 = vld [vmem:[%s0 + $0xf0] sm:$0xff]
  %v63 = vld [vmem:[%s0 + $0xf8] sm:$0xff]
  %v64 = vld [vmem:[%s0 + $0x100] sm:$0xff]
  %v65 = vld [vmem:[%s0 + $0x108] sm:$0xff]
  %v66 = vld [vmem:[%s0 + $0x110] sm:$0xff]
  %v67 = vld [vmem:[%s0 + $0x118] sm:$0xff]
  %v68 = vld [vmem:[%s0 + $0x120] sm:$0xff]
  %v69 = vld [vmem:[%s0 + $0x128] sm:$0xff]
  %v70 = vld [vmem:[%s0 + $0x130] sm:$0xff]
  %v71 = vld [vmem:[%s0 + $0x138] sm:$0xff]
  %v72 = vld [vmem:[%s0 + $0x140] sm:$0xff]
  %v73 = vld [vmem:[%s0 + $0x148] sm:$0xff]
  %v74 = vld [vmem:[%s0 + $0x150] sm:$0xff]
  %v75 = vld [vmem:[%s0 + $0x158] sm:$0xff]
  %v76 = vld [vmem:[%s0 + $0x160] sm:$0xff]
  %v77 = vld [vmem:[%s0 + $0x168] sm:$0xff]
  %v78 = vld [vmem:[%s0 + $0x170] sm:$0xff]
  %v79 = vld [vmem:[%s0 + $0x178] sm:$0xff]
  %v80 = vld [vmem:[%s0 + $0x180] sm:$0xff]
  %v81 = vld [vmem:[%s0 + $0x188] sm:$0xff]
  %v82 = vld [vmem:[%s0 + $0x190] sm:$0xff]
  %v83 = vld [vmem:[%s0 + $0x198] sm:$0xff]
  %v84 = vld [vmem:[%s0 + $0x1a0] sm:$0xff]
  %v85 = vld [vmem:[%s0 + $0x1a8] sm:$0xff]
  %v86 = vld [vmem:[%s0 + $0x1b0] sm:$0xff]
  %v87 = vld [vmem:[%s0 + $0x1b8] sm:$0xff]
  %v88 = vld [vmem:[%s0 + $0x1c0] sm:$0xff]
  %v89 = vld [vmem:[%s0 + $0x1c8] sm:$0xff]
  %v90 = vld [vmem:[%s0 + $0x1d0] sm:$0xff]
  %v91 = vld [vmem:[%s0 + $0x1d8] sm:$0xff]
  %v92 = vld [vmem:[%s0 + $0x1e0] sm:$0xff]
  %v93 = vld [vmem:[%s0 + $0x1e8] sm:$0xff]
  %v94 = vld [vmem:[%s0 + $0x1f0] sm:$0xff]
  %v95 = vld [vmem:[%s0 + $0x1f8] sm:$0xff]
  %v96 = vld [vmem:[%s0 + $0x200] sm:$0xff]
  %v97 = vld [vmem:[%s0 + $0x208] sm:$0xff]
  %v98 = vld [vmem:[%s0 + $0x210] sm:$0xff]
  %v99 = vld [vmem:[%s0 + $0x218] sm:$0xff]
  %v100 = vld [vmem:[%s0 + $0x220] sm:$0xff]
  %v101 = vld [vmem:[%s0 + $0x228] sm:$0xff]
  %v102 = vld [vmem:[%s0 + $0x230] sm:$0xff]
  %v103 = vld [vmem:[%s0 + $0x238] sm:$0xff]
  %v104 = vld [vmem:[%s0 + $0x240] sm:$0xff]
  %v105 = vld [vmem:[%s0 + $0x248] sm:$0xff]
  %v106 = vld [vmem:[%s0 + $0x250] sm:$0xff]
  %v107 = vld [vmem:[%s0 + $0x258] sm:$0xff]
  %v108 = vld [vmem:[%s0 + $0x260] sm:$0xff]
  %v109 = vld [vmem:[%s0 + $0x268] sm:$0xff]
  %v110 = vld [vmem:[%s0 + $0x270] sm:$0x3f]
  %v111 = vld [vmem:[%s1] sm:$0xff]
  %v112 = vld [vmem:[%s1 + $0x8] sm:$0xff]
  %v113 = vld [vmem:[%s1 + $0x10] sm:$0xff]
  %v114 = vld [vmem:[%s1 + $0x18] sm:$0xff]
  %v115 = vld [vmem:[%s1 + $0x20] sm:$0xff]
  %v116 = vld [vmem:[%s1 + $0x28] sm:$0xff]
  %v117 = vld [vmem:[%s1 + $0x30] sm:$0xff]
  %v118 = vld [vmem:[%s1 + $0x38] sm:$0xff]
  %v119 = vld [vmem:[%s1 + $0x40] sm:$0xff]
  %v120 = vld [vmem:[%s1 + $0x48] sm:$0xff]
  %v121 = vld [vmem:[%s1 + $0x50] sm:$0xff]
  %v122 = vld [vmem:[%s1 + $0x58] sm:$0xff]
  %v123 = vld [vmem:[%s1 + $0x60] sm:$0xff]
  %v124 = vld [vmem:[%s1 + $0x68] sm:$0xff]
  %v125 = vld [vmem:[%s1 + $0x70] sm:$0xff]
  %v126 = vld [vmem:[%s1 + $0x78] sm:$0xff]
  %v127 = vld [vmem:[%s1 + $0x80] sm:$0xff]
  %v128 = vld [vmem:[%s1 + $0x88] sm:$0xff]
  %v129 = vld [vmem:[%s1 + $0x90] sm:$0xff]
  %v130 = vld [vmem:[%s1 + $0x98] sm:$0xff]
  %v131 = vld [vmem:[%s1 + $0xa0] sm:$0xff]
  %v132 = vld [vmem:[%s1 + $0xa8] sm:$0xff]
  %v133 = vld [vmem:[%s1 + $0xb0] sm:$0xff]
  %v134 = vld [vmem:[%s1 + $0xb8] sm:$0xff]
  %v135 = vld [vmem:[%s1 + $0xc0] sm:$0xff]
  %v136 = vld [vmem:[%s1 + $0xc8] sm:$0xff]
  %v137 = vld [vmem:[%s1 + $0xd0] sm:$0xff]
  %v138 = vld [vmem:[%s1 + $0xd8] sm:$0xff]
  %v139 = vld [vmem:[%s1 + $0xe0] sm:$0xff]
  %v140 = vld [vmem:[%s1 + $0xe8] sm:$0xff]
  %v141 = vld [vmem:[%s1 + $0xf0] sm:$0xff]
  %v142 = vld [vmem:[%s1 + $0xf8] sm:$0xff]
  %v143 = vld [vmem:[%s1 + $0x100] sm:$0xff]
  %v144 = vld [vmem:[%s1 + $0x108] sm:$0xff]
  %v145 = vld [vmem:[%s1 + $0x110] sm:$0xff]
  %v146 = vld [vmem:[%s1 + $0x118] sm:$0xff]
  %v147 = vld [vmem:[%s1 + $0x120] sm:$0xff]
  %v148 = vld [vmem:[%s1 + $0x128] sm:$0xff]
  %v149 = vld [vmem:[%s1 + $0x130] sm:$0xff]
  %v150 = vld [vmem:[%s1 + $0x138] sm:$0xff]
  %v151 = vld [vmem:[%s1 + $0x140] sm:$0xff]
  %v152 = vld [vmem:[%s1 + $0x148] sm:$0xff]
  %v153 = vld [vmem:[%s1 + $0x150] sm:$0xff]
  %v154 = vld [vmem:[%s1 + $0x158] sm:$0xff]
  %v155 = vld [vmem:[%s1 + $0x160] sm:$0xff]
  %v156 = vld [vmem:[%s1 + $0x168] sm:$0xff]
  %v157 = vld [vmem:[%s1 + $0x170] sm:$0xff]
  %v158 = vld [vmem:[%s1 + $0x178] sm:$0xff]
  %v159 = vld [vmem:[%s1 + $0x180] sm:$0xff]
  %v160 = vld [vmem:[%s1 + $0x188] sm:$0xff]
  %v161 = vld [vmem:[%s1 + $0x190] sm:$0xf]
  %v162 = vld [vmem:[%s1 + $0x198] sm:$0xf]
  %v163 = vld [vmem:[%s1 + $0x1a0] sm:$0xf]
  %v164 = vld [vmem:[%s1 + $0x1a8] sm:$0xf]
  %v165 = vld [vmem:[%s1 + $0x1b0] sm:$0xf]
  %v166 = vld [vmem:[%s2] sm:$0xff]
  %v167 = vld [vmem:[%s2 + $0x8] sm:$0xff]
  %v168 = vld [vmem:[%s2 + $0x10] sm:$0xff]
  %v169 = vld [vmem:[%s2 + $0x18] sm:$0xff]
  %v170 = vld [vmem:[%s2 + $0x20] sm:$0xff]
  %v171 = vld [vmem:[%s2 + $0x28] sm:$0xff]
  %v172 = vld [vmem:[%s2 + $0x30] sm:$0xff]
  %v173 = vld [vmem:[%s2 + $0x38] sm:$0xff]
  %v174 = vld [vmem:[%s2 + $0x40] sm:$0xff]
  %v175 = vld [vmem:[%s2 + $0x48] sm:$0xff]
  %v176 = vld [vmem:[%s2 + $0x50] sm:$0xf]
  %178 = vset.pattern.permute.xlu0 0
  %179 = vperm.xlu0 %178, %v166
  %v180 = vpop.permute.xlu0 %179
  %183 = vset.pattern.permute.xlu0 0
  %184 = vperm.xlu0 %183, %v167
  %v185 = vpop.permute.xlu0 %184
  %188 = vset.pattern.permute.xlu0 0
  %189 = vperm.xlu0 %188, %v168
  %v190 = vpop.permute.xlu0 %189
  %193 = vset.pattern.permute.xlu0 0
  %194 = vperm.xlu0 %193, %v169
  %v195 = vpop.permute.xlu0 %194
  %198 = vset.pattern.permute.xlu0 0
  %199 = vperm.xlu0 %198, %v170
  %v200 = vpop.permute.xlu0 %199
  %203 = vset.pattern.permute.xlu0 0
  %204 = vperm.xlu0 %203, %v171
  %v205 = vpop.permute.xlu0 %204
  %208 = vset.pattern.permute.xlu0 0
  %209 = vperm.xlu0 %208, %v172
  %v210 = vpop.permute.xlu0 %209
  %213 = vset.pattern.permute.xlu0 0
  %214 = vperm.xlu0 %213, %v173
  %v215 = vpop.permute.xlu0 %214
  %218 = vset.pattern.permute.xlu0 0
  %219 = vperm.xlu0 %218, %v174
  %v220 = vpop.permute.xlu0 %219
  %223 = vset.pattern.permute.xlu0 0
  %224 = vperm.xlu0 %223, %v175
  %v225 = vpop.permute.xlu0 %224
  %228 = vset.pattern.permute.xlu0 0
  %229 = vperm.xlu0 %228, %v176
  %v230 = vpop.permute.xlu0 %229
  %vm232 = vcmask 965632
  %v234 = vsel %vm232, %v115, 0
  %v237 = vsel %vm232, %v120, 0
  %v240 = vsel %vm232, %v125, 0
  %v243 = vsel %vm232, %v130, 0
  %v246 = vsel %vm232, %v135, 0
  %v249 = vsel %vm232, %v140, 0
  %v252 = vsel %vm232, %v145, 0
  %v255 = vsel %vm232, %v150, 0
  %v258 = vsel %vm232, %v155, 0
  %v261 = vsel %vm232, %v160, 0
  %v264 = vsel %vm232, %v165, 0
  %vm266 = vcmask 1045504
  %v268 = vsel %vm266, %v110, 0
  %270 = vmatprep.subr.mxu0 0.0
  %271 = vmatpush1.msra.mxu0 %v47
  %272 = vmatprep.subr.mxu0 0.0
  %273 = vmatpush1.msra.mxu0 %v46
  %274 = vmatprep.subr.mxu0 0.0
  %275 = vmatpush1.msra.mxu0 %v45
  %276 = vmatprep.subr.mxu0 0.0
  %277 = vmatpush1.msra.mxu0 %v44
  %278 = vmatprep.subr.mxu0 0.0
  %279 = vmatpush1.msra.mxu0 %v43
  %280 = vmatprep.subr.mxu0 0.0
  %281 = vmatpush1.msra.mxu0 %v42
  %282 = vmatprep.subr.mxu0 0.0
  %283 = vmatpush1.msra.mxu0 %v41
  %284 = vmatprep.subr.mxu0 0.0
  %285 = vmatpush1.msra.mxu0 %v40
  %286 = vmatprep.subr.mxu0 0.0
  %287 = vmatpush1.msra.mxu0 %v39
  %288 = vmatprep.subr.mxu0 0.0
  %289 = vmatpush1.msra.mxu0 %v38
  %290 = vmatprep.subr.mxu0 0.0
  %291 = vmatpush1.msra.mxu0 %v37
  %292 = vmatprep.subr.mxu0 0.0
  %293 = vmatpush1.msra.mxu0 %v36
  %294 = vmatprep.subr.mxu0 0.0
  %295 = vmatpush1.msra.mxu0 %v35
  %296 = vmatprep.subr.mxu0 0.0
  %297 = vmatpush1.msra.mxu0 %v34
  %298 = vmatprep.subr.mxu0 0.0
  %299 = vmatpush1.msra.mxu0 %v33
  %300 = vmatprep.subr.mxu0 0.0
  %301 = vmatpush1.msra.mxu0 %v32
  %302 = vmatprep.subr.mxu0 0.0
  %303 = vmatpush2.msra.mxu0 %v63
  %304 = vmatprep.subr.mxu0 0.0
  %305 = vmatpush2.msra.mxu0 %v62
  %306 = vmatprep.subr.mxu0 0.0
  %307 = vmatpush2.msra.mxu0 %v61
  %308 = vmatprep.subr.mxu0 0.0
  %309 = vmatpush2.msra.mxu0 %v60
  %310 = vmatprep.subr.mxu0 0.0
  %311 = vmatpush2.msra.mxu0 %v59
  %312 = vmatprep.subr.mxu0 0.0
  %313 = vmatpush2.msra.mxu0 %v58
  %314 = vmatprep.subr.mxu0 0.0
  %315 = vmatpush2.msra.mxu0 %v57
  %316 = vmatprep.subr.mxu0 0.0
  %317 = vmatpush2.msra.mxu0 %v56
  %318 = vmatprep.subr.mxu0 0.0
  %319 = vmatpush2.msra.mxu0 %v55
  %320 = vmatprep.subr.mxu0 0.0
  %321 = vmatpush2.msra.mxu0 %v54
  %322 = vmatprep.subr.mxu0 0.0
  %323 = vmatpush2.msra.mxu0 %v53
  %324 = vmatprep.subr.mxu0 0.0
  %325 = vmatpush2.msra.mxu0 %v52
  %326 = vmatprep.subr.mxu0 0.0
  %327 = vmatpush2.msra.mxu0 %v51
  %328 = vmatprep.subr.mxu0 0.0
  %329 = vmatpush2.msra.mxu0 %v50
  %330 = vmatprep.subr.mxu0 0.0
  %331 = vmatpush2.msra.mxu0 %v49
  %332 = vmatprep.subr.mxu0 0.0
  %333 = vmatpush2.msra.mxu0 %v48
  %334 = vmatprep.mubr.f32.mxu0 %v112
  %335 = vmatmul.mubr.f32.gmra.mxu0 %v111
  %v336 = vpop.f32.mrf.mxu0
  %v337 = vadd.f32 %v180, %v336
  %v338 = vpop.f32.mrf.mxu0
  %339 = vmatprep.mubr.f32.mxu0 %v117
  %340 = vmatmul.mubr.f32.gmra.mxu0 %v116
  %v341 = vpop.f32.mrf.mxu0
  %v342 = vadd.f32 %v185, %v341
  %v343 = vpop.f32.mrf.mxu0
  %344 = vmatprep.mubr.f32.mxu0 %v122
  %345 = vmatmul.mubr.f32.gmra.mxu0 %v121
  %v346 = vpop.f32.mrf.mxu0
  %v347 = vadd.f32 %v190, %v346
  %v348 = vpop.f32.mrf.mxu0
  %349 = vmatprep.mubr.f32.mxu0 %v127
  %350 = vmatmul.mubr.f32.gmra.mxu0 %v126
  %v351 = vpop.f32.mrf.mxu0
  %v352 = vadd.f32 %v195, %v351
  %v353 = vpop.f32.mrf.mxu0
  %354 = vmatprep.mubr.f32.mxu0 %v132
  %355 = vmatmul.mubr.f32.gmra.mxu0 %v131
  %v356 = vpop.f32.mrf.mxu0
  %v357 = vadd.f32 %v200, %v356
  %v358 = vpop.f32.mrf.mxu0
  %359 = vmatprep.mubr.f32.mxu0 %v137
  %360 = vmatmul.mubr.f32.gmra.mxu0 %v136
  %v361 = vpop.f32.mrf.mxu0
  %v362 = vadd.f32 %v205, %v361
  %v363 = vpop.f32.mrf.mxu0
  %364 = vmatprep.mubr.f32.mxu0 %v142
  %365 = vmatmul.mubr.f32.gmra.mxu0 %v141
  %v366 = vpop.f32.mrf.mxu0
  %v367 = vadd.f32 %v210, %v366
  %v368 = vpop.f32.mrf.mxu0
  %369 = vmatprep.mubr.f32.mxu0 %v147
  %370 = vmatmul.mubr.f32.gmra.mxu0 %v146
  %v371 = vpop.f32.mrf.mxu0
  %v372 = vadd.f32 %v215, %v371
  %v373 = vpop.f32.mrf.mxu0
  %374 = vmatprep.mubr.f32.mxu0 %v152
  %375 = vmatmul.mubr.f32.gmra.mxu0 %v151
  %v376 = vpop.f32.mrf.mxu0
  %v377 = vadd.f32 %v220, %v376
  %v378 = vpop.f32.mrf.mxu0
  %379 = vmatprep.mubr.f32.mxu0 %v157
  %380 = vmatmul.mubr.f32.gmra.mxu0 %v156
  %v381 = vpop.f32.mrf.mxu0
  %v382 = vadd.f32 %v225, %v381
  %v383 = vpop.f32.mrf.mxu0
  %384 = vmatprep.mubr.f32.mxu0 %v162
  %385 = vmatmul.mubr.f32.gmra.mxu0 %v161
  %v386 = vpop.f32.mrf.mxu0
  %v387 = vadd.f32 %v230, %v386
  %v388 = vpop.f32.mrf.mxu0
  %389 = vdwg.mxu0
  %390 = vmatprep.subr.mxu0 0.0
  %391 = vmatpush1.msra.mxu0 %v79
  %392 = vmatprep.subr.mxu0 0.0
  %393 = vmatpush1.msra.mxu0 %v78
  %394 = vmatprep.subr.mxu0 0.0
  %395 = vmatpush1.msra.mxu0 %v77
  %396 = vmatprep.subr.mxu0 0.0
  %397 = vmatpush1.msra.mxu0 %v76
  %398 = vmatprep.subr.mxu0 0.0
  %399 = vmatpush1.msra.mxu0 %v75
  %400 = vmatprep.subr.mxu0 0.0
  %401 = vmatpush1.msra.mxu0 %v74
  %402 = vmatprep.subr.mxu0 0.0
  %403 = vmatpush1.msra.mxu0 %v73
  %404 = vmatprep.subr.mxu0 0.0
  %405 = vmatpush1.msra.mxu0 %v72
  %406 = vmatprep.subr.mxu0 0.0
  %407 = vmatpush1.msra.mxu0 %v71
  %408 = vmatprep.subr.mxu0 0.0
  %409 = vmatpush1.msra.mxu0 %v70
  %410 = vmatprep.subr.mxu0 0.0
  %411 = vmatpush1.msra.mxu0 %v69
  %412 = vmatprep.subr.mxu0 0.0
  %413 = vmatpush1.msra.mxu0 %v68
  %414 = vmatprep.subr.mxu0 0.0
  %415 = vmatpush1.msra.mxu0 %v67
  %416 = vmatprep.subr.mxu0 0.0
  %417 = vmatpush1.msra.mxu0 %v66
  %418 = vmatprep.subr.mxu0 0.0
  %419 = vmatpush1.msra.mxu0 %v65
  %420 = vmatprep.subr.mxu0 0.0
  %421 = vmatpush1.msra.mxu0 %v64
  %422 = vmatprep.subr.mxu0 0.0
  %423 = vmatpush2.msra.mxu0 %v95
  %424 = vmatprep.subr.mxu0 0.0
  %425 = vmatpush2.msra.mxu0 %v94
  %426 = vmatprep.subr.mxu0 0.0
  %427 = vmatpush2.msra.mxu0 %v93
  %428 = vmatprep.subr.mxu0 0.0
  %429 = vmatpush2.msra.mxu0 %v92
  %430 = vmatprep.subr.mxu0 0.0
  %431 = vmatpush2.msra.mxu0 %v91
  %432 = vmatprep.subr.mxu0 0.0
  %433 = vmatpush2.msra.mxu0 %v90
  %434 = vmatprep.subr.mxu0 0.0
  %435 = vmatpush2.msra.mxu0 %v89
  %436 = vmatprep.subr.mxu0 0.0
  %437 = vmatpush2.msra.mxu0 %v88
  %438 = vmatprep.subr.mxu0 0.0
  %439 = vmatpush2.msra.mxu0 %v87
  %440 = vmatprep.subr.mxu0 0.0
  %441 = vmatpush2.msra.mxu0 %v86
  %442 = vmatprep.subr.mxu0 0.0
  %443 = vmatpush2.msra.mxu0 %v85
  %444 = vmatprep.subr.mxu0 0.0
  %445 = vmatpush2.msra.mxu0 %v84
  %446 = vmatprep.subr.mxu0 0.0
  %447 = vmatpush2.msra.mxu0 %v83
  %448 = vmatprep.subr.mxu0 0.0
  %449 = vmatpush2.msra.mxu0 %v82
  %450 = vmatprep.subr.mxu0 0.0
  %451 = vmatpush2.msra.mxu0 %v81
  %452 = vmatprep.subr.mxu0 0.0
  %453 = vmatpush2.msra.mxu0 %v80
  %454 = vmatprep.mubr.f32.mxu0 %v114
  %455 = vmatmul.mubr.f32.gmra.mxu0 %v113
  %v456 = vpop.f32.mrf.mxu0
  %v457 = vadd.f32 %v337, %v456
  %v458 = vpop.f32.mrf.mxu0
  %459 = vmatprep.mubr.f32.mxu0 %v119
  %460 = vmatmul.mubr.f32.gmra.mxu0 %v118
  %v461 = vpop.f32.mrf.mxu0
  %v462 = vadd.f32 %v342, %v461
  %v463 = vpop.f32.mrf.mxu0
  %464 = vmatprep.mubr.f32.mxu0 %v124
  %465 = vmatmul.mubr.f32.gmra.mxu0 %v123
  %v466 = vpop.f32.mrf.mxu0
  %v467 = vadd.f32 %v347, %v466
  %v468 = vpop.f32.mrf.mxu0
  %469 = vmatprep.mubr.f32.mxu0 %v129
  %470 = vmatmul.mubr.f32.gmra.mxu0 %v128
  %v471 = vpop.f32.mrf.mxu0
  %v472 = vadd.f32 %v352, %v471
  %v473 = vpop.f32.mrf.mxu0
  %474 = vmatprep.mubr.f32.mxu0 %v134
  %475 = vmatmul.mubr.f32.gmra.mxu0 %v133
  %v476 = vpop.f32.mrf.mxu0
  %v477 = vadd.f32 %v357, %v476
  %v478 = vpop.f32.mrf.mxu0
  %479 = vmatprep.mubr.f32.mxu0 %v139
  %480 = vmatmul.mubr.f32.gmra.mxu0 %v138
  %v481 = vpop.f32.mrf.mxu0
  %v482 = vadd.f32 %v362, %v481
  %v483 = vpop.f32.mrf.mxu0
  %484 = vmatprep.mubr.f32.mxu0 %v144
  %485 = vmatmul.mubr.f32.gmra.mxu0 %v143
  %v486 = vpop.f32.mrf.mxu0
  %v487 = vadd.f32 %v367, %v486
  %v488 = vpop.f32.mrf.mxu0
  %489 = vmatprep.mubr.f32.mxu0 %v149
  %490 = vmatmul.mubr.f32.gmra.mxu0 %v148
  %v491 = vpop.f32.mrf.mxu0
  %v492 = vadd.f32 %v372, %v491
  %v493 = vpop.f32.mrf.mxu0
  %494 = vmatprep.mubr.f32.mxu0 %v154
  %495 = vmatmul.mubr.f32.gmra.mxu0 %v153
  %v496 = vpop.f32.mrf.mxu0
  %v497 = vadd.f32 %v377, %v496
  %v498 = vpop.f32.mrf.mxu0
  %499 = vmatprep.mubr.f32.mxu0 %v159
  %500 = vmatmul.mubr.f32.gmra.mxu0 %v158
  %v501 = vpop.f32.mrf.mxu0
  %v502 = vadd.f32 %v382, %v501
  %v503 = vpop.f32.mrf.mxu0
  %504 = vmatprep.mubr.f32.mxu0 %v164
  %505 = vmatmul.mubr.f32.gmra.mxu0 %v163
  %v506 = vpop.f32.mrf.mxu0
  %v507 = vadd.f32 %v387, %v506
  %v508 = vpop.f32.mrf.mxu0
  %509 = vdwg.mxu0
  %510 = vmatprep.subr.mxu0 0.0
  %511 = vmatpush1.msra.mxu0 0.0
  %512 = vmatprep.subr.mxu0 0.0
  %513 = vmatpush1.msra.mxu0 %v268
  %514 = vmatprep.subr.mxu0 0.0
  %515 = vmatpush1.msra.mxu0 %v109
  %516 = vmatprep.subr.mxu0 0.0
  %517 = vmatpush1.msra.mxu0 %v108
  %518 = vmatprep.subr.mxu0 0.0
  %519 = vmatpush1.msra.mxu0 %v107
  %520 = vmatprep.subr.mxu0 0.0
  %521 = vmatpush1.msra.mxu0 %v106
  %522 = vmatprep.subr.mxu0 0.0
  %523 = vmatpush1.msra.mxu0 %v105
  %524 = vmatprep.subr.mxu0 0.0
  %525 = vmatpush1.msra.mxu0 %v104
  %526 = vmatprep.subr.mxu0 0.0
  %527 = vmatpush1.msra.mxu0 %v103
  %528 = vmatprep.subr.mxu0 0.0
  %529 = vmatpush1.msra.mxu0 %v102
  %530 = vmatprep.subr.mxu0 0.0
  %531 = vmatpush1.msra.mxu0 %v101
  %532 = vmatprep.subr.mxu0 0.0
  %533 = vmatpush1.msra.mxu0 %v100
  %534 = vmatprep.subr.mxu0 0.0
  %535 = vmatpush1.msra.mxu0 %v99
  %536 = vmatprep.subr.mxu0 0.0
  %537 = vmatpush1.msra.mxu0 %v98
  %538 = vmatprep.subr.mxu0 0.0
  %539 = vmatpush1.msra.mxu0 %v97
  %540 = vmatprep.subr.mxu0 0.0
  %541 = vmatpush1.msra.mxu0 %v96
  %542 = vmatprep.subr.mxu0 0.0
  %543 = vmatpush2.msra.mxu0 0.0
  %544 = vmatprep.subr.mxu0 0.0
  %545 = vmatpush2.msra.mxu0 0.0
  %546 = vmatprep.subr.mxu0 0.0
  %547 = vmatpush2.msra.mxu0 0.0
  %548 = vmatprep.subr.mxu0 0.0
  %549 = vmatpush2.msra.mxu0 0.0
  %550 = vmatprep.subr.mxu0 0.0
  %551 = vmatpush2.msra.mxu0 0.0
  %552 = vmatprep.subr.mxu0 0.0
  %553 = vmatpush2.msra.mxu0 0.0
  %554 = vmatprep.subr.mxu0 0.0
  %555 = vmatpush2.msra.mxu0 0.0
  %556 = vmatprep.subr.mxu0 0.0
  %557 = vmatpush2.msra.mxu0 0.0
  %558 = vmatprep.subr.mxu0 0.0
  %559 = vmatpush2.msra.mxu0 0.0
  %560 = vmatprep.subr.mxu0 0.0
  %561 = vmatpush2.msra.mxu0 0.0
  %562 = vmatprep.subr.mxu0 0.0
  %563 = vmatpush2.msra.mxu0 0.0
  %564 = vmatprep.subr.mxu0 0.0
  %565 = vmatpush2.msra.mxu0 0.0
  %566 = vmatprep.subr.mxu0 0.0
  %567 = vmatpush2.msra.mxu0 0.0
  %568 = vmatprep.subr.mxu0 0.0
  %569 = vmatpush2.msra.mxu0 0.0
  %570 = vmatprep.subr.mxu0 0.0
  %571 = vmatpush2.msra.mxu0 0.0
  %572 = vmatprep.subr.mxu0 0.0
  %573 = vmatpush2.msra.mxu0 0.0
  %574 = vmatprep.mubr.f32.mxu0 0.0
  %575 = vmatmul.mubr.f32.gmra.mxu0 %v234
  %v576 = vpop.f32.mrf.mxu0
  %v577 = vadd.f32 %v457, %v576
  %v578 = vpop.f32.mrf.mxu0
  %579 = vmatprep.mubr.f32.mxu0 0.0
  %580 = vmatmul.mubr.f32.gmra.mxu0 %v237
  %v581 = vpop.f32.mrf.mxu0
  %v582 = vadd.f32 %v462, %v581
  %v583 = vpop.f32.mrf.mxu0
  %584 = vmatprep.mubr.f32.mxu0 0.0
  %585 = vmatmul.mubr.f32.gmra.mxu0 %v240
  %v586 = vpop.f32.mrf.mxu0
  %v587 = vadd.f32 %v467, %v586
  %v588 = vpop.f32.mrf.mxu0
  %589 = vmatprep.mubr.f32.mxu0 0.0
  %590 = vmatmul.mubr.f32.gmra.mxu0 %v243
  %v591 = vpop.f32.mrf.mxu0
  %v592 = vadd.f32 %v472, %v591
  %v593 = vpop.f32.mrf.mxu0
  %594 = vmatprep.mubr.f32.mxu0 0.0
  %595 = vmatmul.mubr.f32.gmra.mxu0 %v246
  %v596 = vpop.f32.mrf.mxu0
  %v597 = vadd.f32 %v477, %v596
  %v598 = vpop.f32.mrf.mxu0
  %599 = vmatprep.mubr.f32.mxu0 0.0
  %600 = vmatmul.mubr.f32.gmra.mxu0 %v249
  %v601 = vpop.f32.mrf.mxu0
  %v602 = vadd.f32 %v482, %v601
  %v603 = vpop.f32.mrf.mxu0
  %604 = vmatprep.mubr.f32.mxu0 0.0
  %605 = vmatmul.mubr.f32.gmra.mxu0 %v252
  %v606 = vpop.f32.mrf.mxu0
  %v607 = vadd.f32 %v487, %v606
  %v608 = vpop.f32.mrf.mxu0
  %609 = vmatprep.mubr.f32.mxu0 0.0
  %610 = vmatmul.mubr.f32.gmra.mxu0 %v255
  %v611 = vpop.f32.mrf.mxu0
  %v612 = vadd.f32 %v492, %v611
  %v613 = vpop.f32.mrf.mxu0
  %614 = vmatprep.mubr.f32.mxu0 0.0
  %615 = vmatmul.mubr.f32.gmra.mxu0 %v258
  %v616 = vpop.f32.mrf.mxu0
  %v617 = vadd.f32 %v497, %v616
  %v618 = vpop.f32.mrf.mxu0
  %619 = vmatprep.mubr.f32.mxu0 0.0
  %620 = vmatmul.mubr.f32.gmra.mxu0 %v261
  %v621 = vpop.f32.mrf.mxu0
  %v622 = vadd.f32 %v502, %v621
  %v623 = vpop.f32.mrf.mxu0
  %624 = vmatprep.mubr.f32.mxu0 0.0
  %625 = vmatmul.mubr.f32.gmra.mxu0 %v264
  %v626 = vpop.f32.mrf.mxu0
  %v627 = vadd.f32 %v507, %v626
  %v628 = vpop.f32.mrf.mxu0
  %629 = vdwg.mxu0
  %v630 = vmax.f32 %v577, 0.0
  %v631 = vmax.f32 %v582, 0.0
  %v632 = vmax.f32 %v587, 0.0
  %v633 = vmax.f32 %v592, 0.0
  %v634 = vmax.f32 %v597, 0.0
  %v635 = vmax.f32 %v602, 0.0
  %v636 = vmax.f32 %v607, 0.0
  %v637 = vmax.f32 %v612, 0.0
  %v638 = vmax.f32 %v617, 0.0
  %v639 = vmax.f32 %v622, 0.0
  %v640 = vmax.f32 %v627, 0.0
  %v641 = vld [vmem:[%s3] sm:$0xff]
  %v642 = vld [vmem:[%s3 + $0x8] sm:$0xff]
  %v643 = vld [vmem:[%s3 + $0x10] sm:$0xff]
  %v644 = vld [vmem:[%s3 + $0x18] sm:$0xff]
  %v645 = vld [vmem:[%s3 + $0x20] sm:$0xff]
  %v646 = vld [vmem:[%s3 + $0x28] sm:$0xff]
  %v647 = vld [vmem:[%s3 + $0x30] sm:$0xff]
  %v648 = vld [vmem:[%s3 + $0x38] sm:$0xff]
  %v649 = vld [vmem:[%s3 + $0x40] sm:$0xf]
  %v650 = vld [vmem:[%s4] sm:$0xff]
  %v651 = vld [vmem:[%s4 + $0x8] sm:$0xff]
  %v652 = vld [vmem:[%s4 + $0x10] sm:$0xff]
  %v653 = vld [vmem:[%s4 + $0x18] sm:$0xff]
  %v654 = vld [vmem:[%s4 + $0x20] sm:$0xff]
  %v655 = vld [vmem:[%s4 + $0x28] sm:$0xff]
  %v656 = vld [vmem:[%s4 + $0x30] sm:$0xff]
  %v657 = vld [vmem:[%s4 + $0x38] sm:$0xff]
  %v658 = vld [vmem:[%s4 + $0x40] sm:$0xf]
  %660 = vset.pattern.permute.xlu0 0
  %661 = vperm.xlu0 %660, %v650
  %v662 = vpop.permute.xlu0 %661
  %665 = vset.pattern.permute.xlu0 0
  %666 = vperm.xlu0 %665, %v651
  %v667 = vpop.permute.xlu0 %666
  %670 = vset.pattern.permute.xlu0 0
  %671 = vperm.xlu0 %670, %v652
  %v672 = vpop.permute.xlu0 %671
  %675 = vset.pattern.permute.xlu0 0
  %676 = vperm.xlu0 %675, %v653
  %v677 = vpop.permute.xlu0 %676
  %680 = vset.pattern.permute.xlu0 0
  %681 = vperm.xlu0 %680, %v654
  %v682 = vpop.permute.xlu0 %681
  %685 = vset.pattern.permute.xlu0 0
  %686 = vperm.xlu0 %685, %v655
  %v687 = vpop.permute.xlu0 %686
  %690 = vset.pattern.permute.xlu0 0
  %691 = vperm.xlu0 %690, %v656
  %v692 = vpop.permute.xlu0 %691
  %695 = vset.pattern.permute.xlu0 0
  %696 = vperm.xlu0 %695, %v657
  %v697 = vpop.permute.xlu0 %696
  %700 = vset.pattern.permute.xlu0 0
  %701 = vperm.xlu0 %700, %v658
  %v702 = vpop.permute.xlu0 %701
  %vm704 = vcmask 687104
  %v706 = vsel %vm704, %v641, 0
  %v709 = vsel %vm704, %v642, 0
  %v712 = vsel %vm704, %v643, 0
  %v715 = vsel %vm704, %v644, 0
  %v718 = vsel %vm704, %v645, 0
  %v721 = vsel %vm704, %v646, 0
  %v724 = vsel %vm704, %v647, 0
  %v727 = vsel %vm704, %v648, 0
  %v730 = vsel %vm704, %v649, 0
  %vm732 = vcmask 1043456
  %v734 = vsel %vm732, %v640, 0
  %736 = vmatprep.subr.mxu0 0.0
  %737 = vmatpush1.msra.mxu0 0.0
  %738 = vmatprep.subr.mxu0 0.0
  %739 = vmatpush1.msra.mxu0 0.0
  %740 = vmatprep.subr.mxu0 0.0
  %741 = vmatpush1.msra.mxu0 0.0
  %742 = vmatprep.subr.mxu0 0.0
  %743 = vmatpush1.msra.mxu0 0.0
  %744 = vmatprep.subr.mxu0 0.0
  %745 = vmatpush1.msra.mxu0 0.0
  %746 = vmatprep.subr.mxu0 0.0
  %747 = vmatpush1.msra.mxu0 %v734
  %748 = vmatprep.subr.mxu0 0.0
  %749 = vmatpush1.msra.mxu0 %v639
  %750 = vmatprep.subr.mxu0 0.0
  %751 = vmatpush1.msra.mxu0 %v638
  %752 = vmatprep.subr.mxu0 0.0
  %753 = vmatpush1.msra.mxu0 %v637
  %754 = vmatprep.subr.mxu0 0.0
  %755 = vmatpush1.msra.mxu0 %v636
  %756 = vmatprep.subr.mxu0 0.0
  %757 = vmatpush1.msra.mxu0 %v635
  %758 = vmatprep.subr.mxu0 0.0
  %759 = vmatpush1.msra.mxu0 %v634
  %760 = vmatprep.subr.mxu0 0.0
  %761 = vmatpush1.msra.mxu0 %v633
  %762 = vmatprep.subr.mxu0 0.0
  %763 = vmatpush1.msra.mxu0 %v632
  %764 = vmatprep.subr.mxu0 0.0
  %765 = vmatpush1.msra.mxu0 %v631
  %766 = vmatprep.subr.mxu0 0.0
  %767 = vmatpush1.msra.mxu0 %v630
  %768 = vmatprep.subr.mxu0 0.0
  %769 = vmatpush2.msra.mxu0 0.0
  %770 = vmatprep.subr.mxu0 0.0
  %771 = vmatpush2.msra.mxu0 0.0
  %772 = vmatprep.subr.mxu0 0.0
  %773 = vmatpush2.msra.mxu0 0.0
  %774 = vmatprep.subr.mxu0 0.0
  %775 = vmatpush2.msra.mxu0 0.0
  %776 = vmatprep.subr.mxu0 0.0
  %777 = vmatpush2.msra.mxu0 0.0
  %778 = vmatprep.subr.mxu0 0.0
  %779 = vmatpush2.msra.mxu0 0.0
  %780 = vmatprep.subr.mxu0 0.0
  %781 = vmatpush2.msra.mxu0 0.0
  %782 = vmatprep.subr.mxu0 0.0
  %783 = vmatpush2.msra.mxu0 0.0
  %784 = vmatprep.subr.mxu0 0.0
  %785 = vmatpush2.msra.mxu0 0.0
  %786 = vmatprep.subr.mxu0 0.0
  %787 = vmatpush2.msra.mxu0 0.0
  %788 = vmatprep.subr.mxu0 0.0
  %789 = vmatpush2.msra.mxu0 0.0
  %790 = vmatprep.subr.mxu0 0.0
  %791 = vmatpush2.msra.mxu0 0.0
  %792 = vmatprep.subr.mxu0 0.0
  %793 = vmatpush2.msra.mxu0 0.0
  %794 = vmatprep.subr.mxu0 0.0
  %795 = vmatpush2.msra.mxu0 0.0
  %796 = vmatprep.subr.mxu0 0.0
  %797 = vmatpush2.msra.mxu0 0.0
  %798 = vmatprep.subr.mxu0 0.0
  %799 = vmatpush2.msra.mxu0 0.0
  %800 = vmatprep.mubr.f32.mxu0 0.0
  %801 = vmatmul.mubr.f32.gmra.mxu0 %v706
  %v802 = vpop.f32.mrf.mxu0
  %v803 = vadd.f32 %v662, %v802
  %v804 = vpop.f32.mrf.mxu0
  %805 = vmatprep.mubr.f32.mxu0 0.0
  %806 = vmatmul.mubr.f32.gmra.mxu0 %v709
  %v807 = vpop.f32.mrf.mxu0
  %v808 = vadd.f32 %v667, %v807
  %v809 = vpop.f32.mrf.mxu0
  %810 = vmatprep.mubr.f32.mxu0 0.0
  %811 = vmatmul.mubr.f32.gmra.mxu0 %v712
  %v812 = vpop.f32.mrf.mxu0
  %v813 = vadd.f32 %v672, %v812
  %v814 = vpop.f32.mrf.mxu0
  %815 = vmatprep.mubr.f32.mxu0 0.0
  %816 = vmatmul.mubr.f32.gmra.mxu0 %v715
  %v817 = vpop.f32.mrf.mxu0
  %v818 = vadd.f32 %v677, %v817
  %v819 = vpop.f32.mrf.mxu0
  %820 = vmatprep.mubr.f32.mxu0 0.0
  %821 = vmatmul.mubr.f32.gmra.mxu0 %v718
  %v822 = vpop.f32.mrf.mxu0
  %v823 = vadd.f32 %v682, %v822
  %v824 = vpop.f32.mrf.mxu0
  %825 = vmatprep.mubr.f32.mxu0 0.0
  %826 = vmatmul.mubr.f32.gmra.mxu0 %v721
  %v827 = vpop.f32.mrf.mxu0
  %v828 = vadd.f32 %v687, %v827
  %v829 = vpop.f32.mrf.mxu0
  %830 = vmatprep.mubr.f32.mxu0 0.0
  %831 = vmatmul.mubr.f32.gmra.mxu0 %v724
  %v832 = vpop.f32.mrf.mxu0
  %v833 = vadd.f32 %v692, %v832
  %v834 = vpop.f32.mrf.mxu0
  %835 = vmatprep.mubr.f32.mxu0 0.0
  %836 = vmatmul.mubr.f32.gmra.mxu0 %v727
  %v837 = vpop.f32.mrf.mxu0
  %v838 = vadd.f32 %v697, %v837
  %v839 = vpop.f32.mrf.mxu0
  %840 = vmatprep.mubr.f32.mxu0 0.0
  %841 = vmatmul.mubr.f32.gmra.mxu0 %v730
  %v842 = vpop.f32.mrf.mxu0
  %v843 = vadd.f32 %v702, %v842
  %v844 = vpop.f32.mrf.mxu0
  %845 = vdwg.mxu0
  %v846 = vmax.f32 %v803, 0.0
  %v847 = vmax.f32 %v808, 0.0
  %v848 = vmax.f32 %v813, 0.0
  %v849 = vmax.f32 %v818, 0.0
  %v850 = vmax.f32 %v823, 0.0
  %v851 = vmax.f32 %v828, 0.0
  %v852 = vmax.f32 %v833, 0.0
  %v853 = vmax.f32 %v838, 0.0
  %v854 = vmax.f32 %v843, 0.0
  %v855 = vld [vmem:[%s5] sm:$0xff]
  %v856 = vld [vmem:[%s5 + $0x8] sm:$0xff]
  %v857 = vld [vmem:[%s5 + $0x10] sm:$0xff]
  %v858 = vld [vmem:[%s5 + $0x18] sm:$0xff]
  %v859 = vld [vmem:[%s6] sm:$0xff]
  %v860 = vld [vmem:[%s6 + $0x8] sm:$0xff]
  %v861 = vld [vmem:[%s6 + $0x10] sm:$0xff]
  %v862 = vld [vmem:[%s6 + $0x18] sm:$0xff]
  %864 = vset.pattern.permute.xlu0 0
  %865 = vperm.xlu0 %864, %v859
  %v866 = vpop.permute.xlu0 %865
  %869 = vset.pattern.permute.xlu0 0
  %870 = vperm.xlu0 %869, %v860
  %v871 = vpop.permute.xlu0 %870
  %874 = vset.pattern.permute.xlu0 0
  %875 = vperm.xlu0 %874, %v861
  %v876 = vpop.permute.xlu0 %875
  %879 = vset.pattern.permute.xlu0 0
  %880 = vperm.xlu0 %879, %v862
  %v881 = vpop.permute.xlu0 %880
  %vm883 = vcmask 556032
  %v885 = vsel %vm883, %v855, 0
  %v888 = vsel %vm883, %v856, 0
  %v891 = vsel %vm883, %v857, 0
  %v894 = vsel %vm883, %v858, 0
  %v897 = vsel %vm732, %v854, 0
  %899 = vmatprep.subr.mxu0 0.0
  %900 = vmatpush1.msra.mxu0 0.0
  %901 = vmatprep.subr.mxu0 0.0
  %902 = vmatpush1.msra.mxu0 0.0
  %903 = vmatprep.subr.mxu0 0.0
  %904 = vmatpush1.msra.mxu0 0.0
  %905 = vmatprep.subr.mxu0 0.0
  %906 = vmatpush1.msra.mxu0 0.0
  %907 = vmatprep.subr.mxu0 0.0
  %908 = vmatpush1.msra.mxu0 0.0
  %909 = vmatprep.subr.mxu0 0.0
  %910 = vmatpush1.msra.mxu0 0.0
  %911 = vmatprep.subr.mxu0 0.0
  %912 = vmatpush1.msra.mxu0 0.0
  %913 = vmatprep.subr.mxu0 0.0
  %914 = vmatpush1.msra.mxu0 %v897
  %915 = vmatprep.subr.mxu0 0.0
  %916 = vmatpush1.msra.mxu0 %v853
  %917 = vmatprep.subr.mxu0 0.0
  %918 = vmatpush1.msra.mxu0 %v852
  %919 = vmatprep.subr.mxu0 0.0
  %920 = vmatpush1.msra.mxu0 %v851
  %921 = vmatprep.subr.mxu0 0.0
  %922 = vmatpush1.msra.mxu0 %v850
  %923 = vmatprep.subr.mxu0 0.0
  %924 = vmatpush1.msra.mxu0 %v849
  %925 = vmatprep.subr.mxu0 0.0
  %926 = vmatpush1.msra.mxu0 %v848
  %927 = vmatprep.subr.mxu0 0.0
  %928 = vmatpush1.msra.mxu0 %v847
  %929 = vmatprep.subr.mxu0 0.0
  %930 = vmatpush1.msra.mxu0 %v846
  %931 = vmatprep.subr.mxu0 0.0
  %932 = vmatpush2.msra.mxu0 0.0
  %933 = vmatprep.subr.mxu0 0.0
  %934 = vmatpush2.msra.mxu0 0.0
  %935 = vmatprep.subr.mxu0 0.0
  %936 = vmatpush2.msra.mxu0 0.0
  %937 = vmatprep.subr.mxu0 0.0
  %938 = vmatpush2.msra.mxu0 0.0
  %939 = vmatprep.subr.mxu0 0.0
  %940 = vmatpush2.msra.mxu0 0.0
  %941 = vmatprep.subr.mxu0 0.0
  %942 = vmatpush2.msra.mxu0 0.0
  %943 = vmatprep.subr.mxu0 0.0
  %944 = vmatpush2.msra.mxu0 0.0
  %945 = vmatprep.subr.mxu0 0.0
  %946 = vmatpush2.msra.mxu0 0.0
  %947 = vmatprep.subr.mxu0 0.0
  %948 = vmatpush2.msra.mxu0 0.0
  %949 = vmatprep.subr.mxu0 0.0
  %950 = vmatpush2.msra.mxu0 0.0
  %951 = vmatprep.subr.mxu0 0.0
  %952 = vmatpush2.msra.mxu0 0.0
  %953 = vmatprep.subr.mxu0 0.0
  %954 = vmatpush2.msra.mxu0 0.0
  %955 = vmatprep.subr.mxu0 0.0
  %956 = vmatpush2.msra.mxu0 0.0
  %957 = vmatprep.subr.mxu0 0.0
  %958 = vmatpush2.msra.mxu0 0.0
  %959 = vmatprep.subr.mxu0 0.0
  %960 = vmatpush2.msra.mxu0 0.0
  %961 = vmatprep.subr.mxu0 0.0
  %962 = vmatpush2.msra.mxu0 0.0
  %963 = vmatprep.mubr.f32.mxu0 0.0
  %964 = vmatmul.mubr.f32.gmra.mxu0 %v885
  %v965 = vpop.f32.mrf.mxu0
  %v966 = vadd.f32 %v866, %v965
  %v967 = vpop.f32.mrf.mxu0
  %968 = vmatprep.mubr.f32.mxu0 0.0
  %969 = vmatmul.mubr.f32.gmra.mxu0 %v888
  %v970 = vpop.f32.mrf.mxu0
  %v971 = vadd.f32 %v871, %v970
  %v972 = vpop.f32.mrf.mxu0
  %973 = vmatprep.mubr.f32.mxu0 0.0
  %974 = vmatmul.mubr.f32.gmra.mxu0 %v891
  %v975 = vpop.f32.mrf.mxu0
  %v976 = vadd.f32 %v876, %v975
  %v977 = vpop.f32.mrf.mxu0
  %978 = vmatprep.mubr.f32.mxu0 0.0
  %979 = vmatmul.mubr.f32.gmra.mxu0 %v894
  %v980 = vpop.f32.mrf.mxu0
  %v981 = vadd.f32 %v881, %v980
  %v982 = vpop.f32.mrf.mxu0
  %983 = vdwg.mxu0
  %v984 = vmax.f32 %v966, 0.0
  %v985 = vmax.f32 %v971, 0.0
  %v986 = vmax.f32 %v976, 0.0
  %v987 = vmax.f32 %v981, 0.0
  %v988 = vld [vmem:[%s7] sm:$0xff]
  %v989 = vld [vmem:[%s7 + $0x8] sm:$0xff]
  %v990 = vld [vmem:[%s7 + $0x10] sm:$0xff]
  %v991 = vld [vmem:[%s7 + $0x18] sm:$0x3f]
  %v992 = vld [vmem:[%s8] sm:$0xff]
  %v993 = vld [vmem:[%s8 + $0x8] sm:$0xff]
  %v994 = vld [vmem:[%s8 + $0x10] sm:$0xff]
  %v995 = vld [vmem:[%s8 + $0x18] sm:$0x3f]
  %997 = vset.pattern.permute.xlu0 0
  %998 = vperm.xlu0 %997, %v992
  %v999 = vpop.permute.xlu0 %998
  %1002 = vset.pattern.permute.xlu0 0
  %1003 = vperm.xlu0 %1002, %v993
  %v1004 = vpop.permute.xlu0 %1003
  %1007 = vset.pattern.permute.xlu0 0
  %1008 = vperm.xlu0 %1007, %v994
  %v1009 = vpop.permute.xlu0 %1008
  %1012 = vset.pattern.permute.xlu0 0
  %1013 = vperm.xlu0 %1012, %v995
  %v1014 = vpop.permute.xlu0 %1013
  %vm1016 = vcmask 261120
  %v1018 = vsel %vm1016, %v988, 0
  %v1021 = vsel %vm1016, %v989, 0
  %v1024 = vsel %vm1016, %v990, 0
  %v1027 = vsel %vm1016, %v991, 0
  %1029 = vmatprep.subr.mxu0 0.0
  %1030 = vmatpush1.msra.mxu0 0.0
  %1031 = vmatprep.subr.mxu0 0.0
  %1032 = vmatpush1.msra.mxu0 0.0
  %1033 = vmatprep.subr.mxu0 0.0
  %1034 = vmatpush1.msra.mxu0 0.0
  %1035 = vmatprep.subr.mxu0 0.0
  %1036 = vmatpush1.msra.mxu0 0.0
  %1037 = vmatprep.subr.mxu0 0.0
  %1038 = vmatpush1.msra.mxu0 0.0
  %1039 = vmatprep.subr.mxu0 0.0
  %1040 = vmatpush1.msra.mxu0 0.0
  %1041 = vmatprep.subr.mxu0 0.0
  %1042 = vmatpush1.msra.mxu0 0.0
  %1043 = vmatprep.subr.mxu0 0.0
  %1044 = vmatpush1.msra.mxu0 0.0
  %1045 = vmatprep.subr.mxu0 0.0
  %1046 = vmatpush1.msra.mxu0 0.0
  %1047 = vmatprep.subr.mxu0 0.0
  %1048 = vmatpush1.msra.mxu0 0.0
  %1049 = vmatprep.subr.mxu0 0.0
  %1050 = vmatpush1.msra.mxu0 0.0
  %1051 = vmatprep.subr.mxu0 0.0
  %1052 = vmatpush1.msra.mxu0 0.0
  %1053 = vmatprep.subr.mxu0 0.0
  %1054 = vmatpush1.msra.mxu0 %v987
  %1055 = vmatprep.subr.mxu0 0.0
  %1056 = vmatpush1.msra.mxu0 %v986
  %1057 = vmatprep.subr.mxu0 0.0
  %1058 = vmatpush1.msra.mxu0 %v985
  %1059 = vmatprep.subr.mxu0 0.0
  %1060 = vmatpush1.msra.mxu0 %v984
  %1061 = vmatprep.subr.mxu0 0.0
  %1062 = vmatpush2.msra.mxu0 0.0
  %1063 = vmatprep.subr.mxu0 0.0
  %1064 = vmatpush2.msra.mxu0 0.0
  %1065 = vmatprep.subr.mxu0 0.0
  %1066 = vmatpush2.msra.mxu0 0.0
  %1067 = vmatprep.subr.mxu0 0.0
  %1068 = vmatpush2.msra.mxu0 0.0
  %1069 = vmatprep.subr.mxu0 0.0
  %1070 = vmatpush2.msra.mxu0 0.0
  %1071 = vmatprep.subr.mxu0 0.0
  %1072 = vmatpush2.msra.mxu0 0.0
  %1073 = vmatprep.subr.mxu0 0.0
  %1074 = vmatpush2.msra.mxu0 0.0
  %1075 = vmatprep.subr.mxu0 0.0
  %1076 = vmatpush2.msra.mxu0 0.0
  %1077 = vmatprep.subr.mxu0 0.0
  %1078 = vmatpush2.msra.mxu0 0.0
  %1079 = vmatprep.subr.mxu0 0.0
  %1080 = vmatpush2.msra.mxu0 0.0
  %1081 = vmatprep.subr.mxu0 0.0
  %1082 = vmatpush2.msra.mxu0 0.0
  %1083 = vmatprep.subr.mxu0 0.0
  %1084 = vmatpush2.msra.mxu0 0.0
  %1085 = vmatprep.subr.mxu0 0.0
  %1086 = vmatpush2.msra.mxu0 0.0
  %1087 = vmatprep.subr.mxu0 0.0
  %1088 = vmatpush2.msra.mxu0 0.0
  %1089 = vmatprep.subr.mxu0 0.0
  %1090 = vmatpush2.msra.mxu0 0.0
  %1091 = vmatprep.subr.mxu0 0.0
  %1092 = vmatpush2.msra.mxu0 0.0
  %1093 = vmatprep.mubr.f32.mxu0 0.0
  %1094 = vmatmul.mubr.f32.gmra.mxu0 %v1018
  %v1095 = vpop.f32.mrf.mxu0
  %v1096 = vadd.f32 %v999, %v1095
  %v1097 = vpop.f32.mrf.mxu0
  %1098 = vmatprep.mubr.f32.mxu0 0.0
  %1099 = vmatmul.mubr.f32.gmra.mxu0 %v1021
  %v1100 = vpop.f32.mrf.mxu0
  %v1101 = vadd.f32 %v1004, %v1100
  %v1102 = vpop.f32.mrf.mxu0
  %1103 = vmatprep.mubr.f32.mxu0 0.0
  %1104 = vmatmul.mubr.f32.gmra.mxu0 %v1024
  %v1105 = vpop.f32.mrf.mxu0
  %v1106 = vadd.f32 %v1009, %v1105
  %v1107 = vpop.f32.mrf.mxu0
  %1108 = vmatprep.mubr.f32.mxu0 0.0
  %1109 = vmatmul.mubr.f32.gmra.mxu0 %v1027
  %v1110 = vpop.f32.mrf.mxu0
  %v1111 = vadd.f32 %v1014, %v1110
  %v1112 = vpop.f32.mrf.mxu0
  %1113 = vdwg.mxu0
  %1114 = vst [vmem:[%s9] sm:$0xff] %v1096
  %1115 = vst [vmem:[%s9 + $0x8] sm:$0xff] %v1101
  %1116 = vst [vmem:[%s9 + $0x10] sm:$0xff] %v1106
  %1117 = vst [vmem:[%s9 + $0x18] sm:$0x3f] %v1111
  // Predicated region
  $region38: #{forward.1} parent=0 // pred_check
    _
  $region39: #{forward.1} parent=0 // pred_check_branch
    %1119 = sbr.rel (0) target = $region41
  $region40: #{forward.1} parent=0 // pred_region
    _
  $region41: #{forward.1} parent=0 // pred_fallthru
    _
  // Predicated region
  $region42: #{forward.1} parent=0 // pred_check
    _
  $region43: #{forward.1} parent=0 // pred_check_branch
    %1121 = sbr.rel (0) target = $region45
  $region44: #{forward.1} parent=0 // pred_region
    _
  $region45: #{forward.1} parent=0 // pred_fallthru
    _

</llo_original>
